<compile_context>
chip_gen: v5e
topology: v5e:2x2
jax: 0.10.0
libtpu: 0.0.40
codegen_flags: <defaults>
</compile_context>

<pallas_src>
import jax
import jax.numpy as jnp
from jax import lax
from jax.experimental import pallas as pl
from jax.experimental.pallas import tpu as pltpu

EPS = 1e-5
FP = 128                      # lane-dense padded feature width for every stage
TILE_MIN = 128                # minimum node tile (lane/sublane friendly)
TILE_MAX = 512                # node row/reduction tile for large graphs
VMEM_LIMIT_BYTES = 32 * 1024 * 1024
X_RESIDENT_MAX_BYTES = 8 * 1024 * 1024   # budget for the (double-buffered) resident X


def _round_up(n, m):
    return ((n + m - 1) // m) * m


def make_conv_kernel(real_dim, tk, fuse_pool, x_resident):
    """GraphConv + LayerNorm(real_dim) + ReLU, optionally fused with mean-pool.

    Grid = (row blocks i, reduction blocks k).  The [N,N] int8 aggregation matmul
    is widened to bf16 and accumulated over k into a VMEM f32 scratch; at the last
    k the fused projection, LayerNorm and ReLU (and optionally the pooled partial)
    run on the finished row block.
    """
    inv_d = 1.0 / float(real_dim)

    def load_xk(xk_ref):
        if x_resident:
            start = pl.multiple_of(pl.program_id(1) * tk, tk)
            return xk_ref[pl.ds(start, tk), :]
        return xk_ref[...]

    def epilogue(acc_ref, xi_ref, w_ref, v_ref):
        # Fused projection [agg | x] @ [[W_rel],[W_root]] as two K=128 MXU passes.
        h = jnp.dot(acc_ref[...].astype(jnp.bfloat16), w_ref[0:FP, :],
                    preferred_element_type=jnp.float32)
        h = h + jnp.dot(xi_ref[...], w_ref[FP:2 * FP, :],
                        preferred_element_type=jnp.float32)
        h = h + v_ref[0:1, :]                               # lin_rel bias
        # Single-pass LayerNorm over the real feature lanes (padded lanes are 0,
        # so summing all 128 lanes and dividing by real_dim is exact).
        s = jnp.sum(h, axis=-1, keepdims=True)
        ss = jnp.sum(h * h, axis=-1, keepdims=True)
        mu = s * inv_d
        var = jnp.maximum(ss * inv_d - mu * mu, 0.0)
        hn = (h - mu) * lax.rsqrt(var + EPS)
        hn = hn * v_ref[1:2, :] + v_ref[2:3, :]             # gamma/beta (0 on pad lanes)
        return jnp.maximum(hn, 0.0)

    if not fuse_pool:
        def kernel(a_ref, xk_ref, xi_ref, w_ref, v_ref, out_ref, acc_ref):
            k = pl.program_id(1)

            @pl.when(k == 0)
            def _():
                acc_ref[...] = jnp.zeros_like(acc_ref)

            acc_ref[...] += jnp.dot(a_ref[...].astype(jnp.bfloat16), load_xk(xk_ref),
                                    preferred_element_type=jnp.float32)

            @pl.when(k == pl.num_programs(1) - 1)
            def _():
                out_ref[...] = epilogue(acc_ref, xi_ref, w_ref,
                                        v_ref).astype(out_ref.dtype)
        return kernel

    def kernel(a_ref, xk_ref, xi_ref, w_ref, v_ref, p_ref, out_ref, acc_ref):
        k = pl.program_id(1)

        @pl.when(k == 0)
        def _():
            acc_ref[...] = jnp.zeros_like(acc_ref)

        acc_ref[...] += jnp.dot(a_ref[...].astype(jnp.bfloat16), load_xk(xk_ref),
                                preferred_element_type=jnp.float32)

        @pl.when(k == pl.num_programs(1) - 1)
        def _():
            h = epilogue(acc_ref, xi_ref, w_ref, v_ref)      # [TM, FP] f32
            # Per-row-block pooled partial (1/count already folded into P);
            # partials are summed over row blocks in the wrapper, which keeps the
            # i axis "parallel" (megacore-shardable) instead of a revisited
            # cross-i accumulator output.
            out_ref[...] = jnp.dot(p_ref[...], h.astype(jnp.bfloat16),
                                   preferred_element_type=jnp.float32)
    return kernel


def _conv_call(adj, h_in, w_fused, vparams, real_dim, tile, x_resident, p_scaled=None):
    n_pad = adj.shape[0]
    gi = n_pad // tile
    gk = n_pad // tile

    a_spec = pl.BlockSpec((tile, tile), lambda i, k: (i, k))
    if x_resident:
        # Whole feature matrix stays VMEM-resident (constant index map); the
        # k-block is sliced inside the kernel, eliminating cross-i re-reads.
        xk_spec = pl.BlockSpec((n_pad, FP), lambda i, k: (0, 0))
    else:
        xk_spec = pl.BlockSpec((tile, FP), lambda i, k: (k, 0))
    xi_spec = pl.BlockSpec((tile, FP), lambda i, k: (i, 0))   # root-term operand
    w_spec = pl.BlockSpec((2 * FP, FP), lambda i, k: (0, 0))
    v_spec = pl.BlockSpec((8, FP), lambda i, k: (0, 0))
    scratch = [pltpu.VMEM((tile, FP), jnp.float32)]
    cparams = pltpu.CompilerParams(
        dimension_semantics=("parallel", "arbitrary"),
        vmem_limit_bytes=VMEM_LIMIT_BYTES)

    if p_scaled is None:
        kernel = make_conv_kernel(real_dim, tile, fuse_pool=False,
                                  x_resident=x_resident)
        return pl.pallas_call(
            kernel,
            out_shape=jax.ShapeDtypeStruct((n_pad, FP), jnp.bfloat16),
            grid_spec=pltpu.PrefetchScalarGridSpec(
                num_scalar_prefetch=0,
                grid=(gi, gk),
                in_specs=[a_spec, xk_spec, xi_spec, w_spec, v_spec],
                out_specs=pl.BlockSpec((tile, FP), lambda i, k: (i, 0)),
                scratch_shapes=scratch),
            compiler_params=cparams,
        )(adj, h_in, h_in, w_fused, vparams)

    g_pad = p_scaled.shape[0]
    kernel = make_conv_kernel(real_dim, tile, fuse_pool=True, x_resident=x_resident)
    p_spec = pl.BlockSpec((g_pad, tile), lambda i, k: (0, i))
    # Per-row-block pooled partials; wrapper sums over axis 0.
    return pl.pallas_call(
        kernel,
        out_shape=jax.ShapeDtypeStruct((gi, g_pad, FP), jnp.float32),
        grid_spec=pltpu.PrefetchScalarGridSpec(
            num_scalar_prefetch=0,
            grid=(gi, gk),
            in_specs=[a_spec, xk_spec, xi_spec, w_spec, v_spec, p_spec],
            out_specs=pl.BlockSpec((None, g_pad, FP), lambda i, k: (i, 0, 0)),
            scratch_shapes=scratch),
        compiler_params=cparams,
    )(adj, h_in, h_in, w_fused, vparams, p_scaled)


def gcn_embedding_forward(x, edge_index, batch, params, num_graphs):
    """Build padded dense operators + packed parameter slabs, run the two kernels."""
    n, f = x.shape
    tile = min(TILE_MAX, max(TILE_MIN, _round_up(n, TILE_MIN)))
    n_pad = _round_up(max(n, tile), tile)
    g_pad = max(_round_up(num_graphs, 8), 8)

    # Dense scatter-add adjacency (messages src -> dst, aggregated at dst), stored
    # as int8 in HBM (exact for edge multiplicities <= 127) and widened to bf16
    # inside the kernel.
    # TODO(synk): build directly in int8 / CSR to avoid the int32 O(N^2) scatter
    # intermediate on the XLA side.
    adj = (jnp.zeros((n_pad, n_pad), jnp.int32)
           .at[edge_index[1], edge_index[0]].add(1)
           .astype(jnp.int8))

    # Node features, zero-padded to lane-dense [n_pad, 128].
    x_pad = jnp.zeros((n_pad, FP), jnp.bfloat16).at[:n, :f].set(
        x.astype(jnp.bfloat16))

    # Mean-pool operator with 1/count folded in; padded nodes/graphs are zero.
    batch_pad = jnp.full((n_pad,), -1, jnp.int32).at[:n].set(batch.astype(jnp.int32))
    onehot = (jnp.arange(g_pad, dtype=jnp.int32)[:, None]
              == batch_pad[None, :]).astype(jnp.float32)
    cnt = onehot.sum(axis=1, keepdims=True)
    p_scaled = (onehot / jnp.maximum(cnt, 1.0)).astype(jnp.bfloat16)

    # Fused, zero-padded weight slabs for [agg | x] @ [[W_rel],[W_root]].
    def fuse_w(w_rel, w_root):
        din, dout = w_rel.shape
        w = jnp.zeros((2 * FP, FP), jnp.float32)
        w = w.at[:din, :dout].set(w_rel)
        w = w.at[FP:FP + din, :dout].set(w_root)
        return w.astype(jnp.bfloat16)

    # Packed per-layer vectors: row 0 = lin_rel bias, row 1 = gamma, row 2 = beta.
    def pack_v(b, gamma, beta):
        dout = b.shape[0]
        v = jnp.zeros((8, FP), jnp.float32)
        v = v.at[0, :dout].set(b)
        v = v.at[1, :dout].set(gamma)
        v = v.at[2, :dout].set(beta)
        return v

    w1 = fuse_w(params["w_rel1"], params["w_root1"])
    v1 = pack_v(params["b_rel1"], params["gamma1"], params["beta1"])
    w2 = fuse_w(params["w_rel2"], params["w_root2"])
    v2 = pack_v(params["b_rel2"], params["gamma2"], params["beta2"])

    # Keep X / h1 fully VMEM-resident for the aggregation when it fits the budget
    # (double-buffered bf16 [n_pad, 128]); stream per-k otherwise.
    x_resident = (2 * n_pad * FP * 2) <= X_RESIDENT_MAX_BYTES

    h1 = _conv_call(adj, x_pad, w1, v1, real_dim=32, tile=tile,
                    x_resident=x_resident)                      # [n_pad, 128] bf16
    partials = _conv_call(adj, h1, w2, v2, real_dim=64, tile=tile,
                          x_resident=x_resident, p_scaled=p_scaled)  # [gi, g_pad, 128] f32
    pooled = partials.sum(axis=0)                               # [g_pad, 128] f32
    return pooled[:num_graphs, :64]


def init_params(key, feature_node_dim=9):
    ks = jax.random.split(key, 4)

    def glorot(k, shape):
        fan_in, fan_out = shape
        lim = (6.0 / (fan_in + fan_out)) ** 0.5
        return jax.random.uniform(k, shape, jnp.float32, -lim, lim)

    return {
        # GraphConv(9 -> 32): lin_rel has bias, lin_root has no bias.
        "w_rel1":  glorot(ks[0], (feature_node_dim, 32)),
        "b_rel1":  jnp.zeros((32,), jnp.float32),
        "w_root1": glorot(ks[1], (feature_node_dim, 32)),
        "gamma1":  jnp.ones((32,), jnp.float32),
        "beta1":   jnp.zeros((32,), jnp.float32),
        # GraphConv(32 -> 64)
        "w_rel2":  glorot(ks[2], (32, 64)),
        "b_rel2":  jnp.zeros((64,), jnp.float32),
        "w_root2": glorot(ks[3], (32, 64)),
        "gamma2":  jnp.ones((64,), jnp.float32),
        "beta2":   jnp.zeros((64,), jnp.float32),
    }


def reference_forward(x, edge_index, batch, params, num_graphs):
    """Pure-JAX f32 reference for a sanity check."""
    n = x.shape[0]
    adj = jnp.zeros((n, n), jnp.float32).at[edge_index[1], edge_index[0]].add(1.0)

    def conv(h, w_root, w_rel, b_rel):
        return adj @ h @ w_rel + b_rel + h @ w_root

    def ln(h, g, b):
        mu = h.mean(-1, keepdims=True)
        var = ((h - mu) ** 2).mean(-1, keepdims=True)
        return (h - mu) * lax.rsqrt(var + EPS) * g + b

    h = jnp.maximum(ln(conv(x, params["w_root1"], params["w_rel1"], params["b_rel1"]),
                       params["gamma1"], params["beta1"]), 0.0)
    h = jnp.maximum(ln(conv(h, params["w_root2"], params["w_rel2"], params["b_rel2"]),
                       params["gamma2"], params["beta2"]), 0.0)
    pool = (jnp.arange(num_graphs)[:, None] == batch[None, :]).astype(jnp.float32)
    cnt = jnp.maximum(pool.sum(axis=1, keepdims=True), 1.0)
    return (pool @ h) / cnt


if __name__ == "__main__":
    key = jax.random.PRNGKey(0)
    k_feat, k_par = jax.random.split(key)

    # Small synthetic problem: 2 graphs x 8 nodes = 16 nodes, 9 node features.
    num_graphs = 2
    nodes_per_graph = 8
    n = num_graphs * nodes_per_graph
    feat_dim = 9

    x = jax.random.normal(k_feat, (n, feat_dim), jnp.float32)
    batch = jnp.repeat(jnp.arange(num_graphs, dtype=jnp.int32), nodes_per_graph)

    # Deterministic bidirectional ring within each graph.
    src, dst = [], []
    for g in range(num_graphs):
        base = g * nodes_per_graph
        for i in range(nodes_per_graph):
            a, b = base + i, base + (i + 1) % nodes_per_graph
            src += [a, b]
            dst += [b, a]
    edge_index = jnp.array([src, dst], dtype=jnp.int32)

    params = init_params(k_par, feat_dim)

    out = gcn_embedding_forward(x, edge_index, batch, params, num_graphs)
    out = jax.block_until_ready(out)

    ref = reference_forward(x, edge_index, batch, params, num_graphs)
    assert out.shape == (num_graphs, 64)
    # Tolerance accounts for bf16 MXU operands inside the kernel (f32 reference).
    assert jnp.allclose(out, ref, atol=5e-2, rtol=5e-2), (
        "mismatch vs reference, max abs diff = %f" % float(jnp.max(jnp.abs(out - ref))))

    print("KERNEL_OK")
</pallas_src>

<mosaic_0001>
module attributes {stable_mosaic.version = 11 : i64} {
  func.func @kernel(%arg0: i32, %arg1: i32, %arg2: memref<128x128xi8, #tpu.memory_space<vmem>>, %arg3: memref<128x128xbf16, #tpu.memory_space<vmem>>, %arg4: memref<128x128xbf16, #tpu.memory_space<vmem>>, %arg5: memref<256x128xbf16, #tpu.memory_space<vmem>>, %arg6: memref<8x128xf32, #tpu.memory_space<vmem>>, %arg7: memref<128x128xbf16, #tpu.memory_space<vmem>>, %arg8: memref<128x128xf32, #tpu.memory_space<vmem>>) attributes {dimension_semantics = [#tpu.dimension_semantics<parallel>, #tpu.dimension_semantics<arbitrary>], iteration_bounds = array<i64: 1, 1>, scalar_prefetch = 0 : i64, scratch_operands = 1 : i64, tpu.core_type = #tpu.core_type<tc>, window_params = [{transform_indices = @transform_0, window_bounds = array<i64: 128, 128>}, {pipeline_mode = #tpu.pipeline_mode<synchronous>, transform_indices = @transform_1, window_bounds = array<i64: 128, 128>}, {transform_indices = @transform_2, window_bounds = array<i64: 128, 128>}, {pipeline_mode = #tpu.pipeline_mode<synchronous>, transform_indices = @transform_3, window_bounds = array<i64: 256, 128>}, {pipeline_mode = #tpu.pipeline_mode<synchronous>, transform_indices = @transform_4, window_bounds = array<i64: 8, 128>}, {transform_indices = @transform_5, window_bounds = array<i64: 128, 128>}]} {
    %c0_i32 = arith.constant 0 : i32
    %0 = arith.cmpi eq, %arg1, %c0_i32 : i32
    %1 = arith.extui %0 : i1 to i32
    %c0_i32_0 = arith.constant 0 : i32
    %2 = arith.cmpi ne, %1, %c0_i32_0 : i32
    scf.if %2 {
      %cst_9 = arith.constant 0.000000e+00 : f32
      %16 = vector.broadcast %cst_9 : f32 to vector<128x128xf32>
      %c0_10 = arith.constant 0 : index
      %c0_11 = arith.constant 0 : index
      %17 = vector.load %arg8[%c0_10, %c0_11] : memref<128x128xf32, #tpu.memory_space<vmem>>, vector<128x128xf32>
      tpu.vector_store %arg8[%c0_10, %c0_11], %16 {strides = array<i32>} : memref<128x128xf32, #tpu.memory_space<vmem>>, vector<128x128xf32>,
    } else {
    }
    %c0 = arith.constant 0 : index
    %c0_1 = arith.constant 0 : index
    %3 = vector.load %arg8[%c0, %c0_1] : memref<128x128xf32, #tpu.memory_space<vmem>>, vector<128x128xf32>
    %c0_2 = arith.constant 0 : index
    %c0_3 = arith.constant 0 : index
    %4 = vector.load %arg2[%c0_2, %c0_3] : memref<128x128xi8, #tpu.memory_space<vmem>>, vector<128x128xi8>
    %5 = arith.sitofp %4 : vector<128x128xi8> to vector<128x128xbf16>
    %c128_i32 = arith.constant 128 : i32
    %6 = arith.muli %arg1, %c128_i32 : i32
    %7 = tpu.assume_multiple %6, 128 : i32
    %8 = arith.index_cast %7 : i32 to index
    %c0_4 = arith.constant 0 : index
    %9 = vector.load %arg3[%8, %c0_4] : memref<128x128xbf16, #tpu.memory_space<vmem>>, vector<128x128xbf16>
    %cst = arith.constant dense<0.000000e+00> : vector<128x128xf32>
    %10 = tpu.matmul %5, %9, %cst {dimension_numbers = #tpu.dot_dimension_numbers<[1], [0], [0], [1], [0, 0, 1, 1], [], []>} : vector<128x128xbf16>, vector<128x128xbf16>, vector<128x128xf32> -> vector<128x128xf32>
    %11 = arith.addf %3, %10 : vector<128x128xf32>
    %c0_5 = arith.constant 0 : index
    %c0_6 = arith.constant 0 : index
    %12 = vector.load %arg8[%c0_5, %c0_6] : memref<128x128xf32, #tpu.memory_space<vmem>>, vector<128x128xf32>
    tpu.vector_store %arg8[%c0_5, %c0_6], %11 {strides = array<i32>} : memref<128x128xf32, #tpu.memory_space<vmem>>, vector<128x128xf32>,
    %c0_i32_7 = arith.constant 0 : i32
    %13 = arith.cmpi eq, %arg1, %c0_i32_7 : i32
    %14 = arith.extui %13 : i1 to i32
    %c0_i32_8 = arith.constant 0 : i32
    %15 = arith.cmpi ne, %14, %c0_i32_8 : i32
    scf.if %15 {
      %c0_9 = arith.constant 0 : index
      %c0_10 = arith.constant 0 : index
      %16 = vector.load %arg8[%c0_9, %c0_10] : memref<128x128xf32, #tpu.memory_space<vmem>>, vector<128x128xf32>
      %17 = arith.truncf %16 : vector<128x128xf32> to vector<128x128xbf16>
      %c0_11 = arith.constant 0 : index
      %c0_12 = arith.constant 0 : index
      %18 = vector.load %arg5[%c0_11, %c0_12] : memref<256x128xbf16, #tpu.memory_space<vmem>>, vector<128x128xbf16>
      %cst_13 = arith.constant dense<0.000000e+00> : vector<128x128xf32>
      %19 = tpu.matmul %17, %18, %cst_13 {dimension_numbers = #tpu.dot_dimension_numbers<[1], [0], [0], [1], [0, 0, 1, 1], [], []>} : vector<128x128xbf16>, vector<128x128xbf16>, vector<128x128xf32> -> vector<128x128xf32>
      %c0_14 = arith.constant 0 : index
      %c0_15 = arith.constant 0 : index
      %20 = vector.load %arg4[%c0_14, %c0_15] : memref<128x128xbf16, #tpu.memory_space<vmem>>, vector<128x128xbf16>
      %c128 = arith.constant 128 : index
      %c0_16 = arith.constant 0 : index
      %21 = vector.load %arg5[%c128, %c0_16] : memref<256x128xbf16, #tpu.memory_space<vmem>>, vector<128x128xbf16>
      %cst_17 = arith.constant dense<0.000000e+00> : vector<128x128xf32>
      %22 = tpu.matmul %20, %21, %cst_17 {dimension_numbers = #tpu.dot_dimension_numbers<[1], [0], [0], [1], [0, 0, 1, 1], [], []>} : vector<128x128xbf16>, vector<128x128xbf16>, vector<128x128xf32> -> vector<128x128xf32>
      %23 = arith.addf %19, %22 : vector<128x128xf32>
      %c0_18 = arith.constant 0 : index
      %c0_19 = arith.constant 0 : index
      %24 = vector.load %arg6[%c0_18, %c0_19] : memref<8x128xf32, #tpu.memory_space<vmem>>, vector<1x128xf32>
      %25 = vector.broadcast %24 : vector<1x128xf32> to vector<128x128xf32>
      %26 = arith.addf %23, %25 : vector<128x128xf32>
      %cst_20 = arith.constant dense<0.000000e+00> : vector<128xf32>
      %27 = vector.multi_reduction <add>, %26, %cst_20 [1] : vector<128x128xf32> to vector<128xf32>
      %28 = vector.shape_cast %27 : vector<128xf32> to vector<128x1xf32>
      %29 = arith.mulf %26, %26 : vector<128x128xf32>
      %cst_21 = arith.constant dense<0.000000e+00> : vector<128xf32>
      %30 = vector.multi_reduction <add>, %29, %cst_21 [1] : vector<128x128xf32> to vector<128xf32>
      %31 = vector.shape_cast %30 : vector<128xf32> to vector<128x1xf32>
      %cst_22 = arith.constant 3.125000e-02 : f32
      %32 = vector.broadcast %cst_22 : f32 to vector<128x1xf32>
      %33 = arith.mulf %28, %32 : vector<128x1xf32>
      %cst_23 = arith.constant 3.125000e-02 : f32
      %34 = vector.broadcast %cst_23 : f32 to vector<128x1xf32>
      %35 = arith.mulf %31, %34 : vector<128x1xf32>
      %36 = arith.mulf %33, %33 : vector<128x1xf32>
      %37 = arith.subf %35, %36 : vector<128x1xf32>
      %cst_24 = arith.constant 0.000000e+00 : f32
      %38 = vector.broadcast %cst_24 : f32 to vector<128x1xf32>
      %39 = arith.maximumf %37, %38 : vector<128x1xf32>
      %40 = vector.broadcast %33 : vector<128x1xf32> to vector<128x128xf32>
      %41 = arith.subf %26, %40 : vector<128x128xf32>
      %cst_25 = arith.constant 9.99999974E-6 : f32
      %42 = vector.broadcast %cst_25 : f32 to vector<128x1xf32>
      %43 = arith.addf %39, %42 : vector<128x1xf32>
      %44 = math.rsqrt %43 : vector<128x1xf32>
      %45 = vector.broadcast %44 : vector<128x1xf32> to vector<128x128xf32>
      %46 = arith.mulf %41, %45 : vector<128x128xf32>
      %c1 = arith.constant 1 : index
      %c0_26 = arith.constant 0 : index
      %47 = vector.load %arg6[%c1, %c0_26] : memref<8x128xf32, #tpu.memory_space<vmem>>, vector<1x128xf32>
      %48 = vector.broadcast %47 : vector<1x128xf32> to vector<128x128xf32>
      %49 = arith.mulf %46, %48 : vector<128x128xf32>
      %c2 = arith.constant 2 : index
      %c0_27 = arith.constant 0 : index
      %50 = vector.load %arg6[%c2, %c0_27] : memref<8x128xf32, #tpu.memory_space<vmem>>, vector<1x128xf32>
      %51 = vector.broadcast %50 : vector<1x128xf32> to vector<128x128xf32>
      %52 = arith.addf %49, %51 : vector<128x128xf32>
      %cst_28 = arith.constant 0.000000e+00 : f32
      %53 = vector.broadcast %cst_28 : f32 to vector<128x128xf32>
      %54 = arith.maximumf %52, %53 : vector<128x128xf32>
      %55 = arith.truncf %54 : vector<128x128xf32> to vector<128x128xbf16>
      %c0_29 = arith.constant 0 : index
      %c0_30 = arith.constant 0 : index
      %56 = vector.load %arg7[%c0_29, %c0_30] : memref<128x128xbf16, #tpu.memory_space<vmem>>, vector<128x128xbf16>
      tpu.vector_store %arg7[%c0_29, %c0_30], %55 {strides = array<i32>} : memref<128x128xbf16, #tpu.memory_space<vmem>>, vector<128x128xbf16>,
    } else {
    }
    return
  }
  func.func @transform_0(%arg0: i32, %arg1: i32) -> (i32, i32) {
    %c0_i32 = arith.constant 0 : i32
    return %arg0, %arg1 : i32, i32
  }
  func.func @transform_1(%arg0: i32, %arg1: i32) -> (i32, i32) {
    %c0_i32 = arith.constant 0 : i32
    %c0_i32_0 = arith.constant 0 : i32
    %c0_i32_1 = arith.constant 0 : i32
    return %c0_i32, %c0_i32_0 : i32, i32
  }
  func.func @transform_2(%arg0: i32, %arg1: i32) -> (i32, i32) {
    %c0_i32 = arith.constant 0 : i32
    %c0_i32_0 = arith.constant 0 : i32
    return %arg0, %c0_i32 : i32, i32
  }
  func.func @transform_3(%arg0: i32, %arg1: i32) -> (i32, i32) {
    %c0_i32 = arith.constant 0 : i32
    %c0_i32_0 = arith.constant 0 : i32
    %c0_i32_1 = arith.constant 0 : i32
    return %c0_i32, %c0_i32_0 : i32, i32
  }
  func.func @transform_4(%arg0: i32, %arg1: i32) -> (i32, i32) {
    %c0_i32 = arith.constant 0 : i32
    %c0_i32_0 = arith.constant 0 : i32
    %c0_i32_1 = arith.constant 0 : i32
    return %c0_i32, %c0_i32_0 : i32, i32
  }
  func.func @transform_5(%arg0: i32, %arg1: i32) -> (i32, i32) {
    %c0_i32 = arith.constant 0 : i32
    %c0_i32_0 = arith.constant 0 : i32
    return %arg0, %c0_i32 : i32, i32
  }
}

</mosaic_0001>

<llo_original>
// kernel: tpu_custom_call.1
$region0: #{tpu_custom_call.1}
  #allocation0 [shape = 'u32[]', space=smem, size = 0x4, offset = 0x4, fixed_abs, tag = 'smem constant byte address 0x4 - core index']
  #allocation1 [shape = 'u32[72,128]{1,0:T(1,128)}', space=vmem, size = 0x9000, scoped, tag = 'internal scratch']
  #allocation2 [shape = 'f32[128,128]{1,0:T(8,128)}', space=vmem, size = 0x10000, scoped, tag = 'scratch operand']
  %s0 = inlined_call_operand.hbm [shape: s8[128,128], index: 0, kind: input, shape index: {}]
  %s1 = inlined_call_operand.hbm [shape: bf16[128,128], index: 1, kind: input, shape index: {}]
  %s2 = inlined_call_operand.hbm [shape: bf16[128,128], index: 2, kind: input, shape index: {}]
  %s3 = inlined_call_operand.hbm [shape: bf16[256,128], index: 3, kind: input, shape index: {}]
  %s4 = inlined_call_operand.hbm [shape: f32[8,128], index: 4, kind: input, shape index: {}]
  %s5 = inlined_call_operand.hbm [shape: bf16[128,128], index: 5, kind: output, shape index: {}]
  %s6 = sld [smem:[#allocation0]]
  $region58: #{tpu_custom_call.1} parent=0
    _
  %s8 = ssub.s32 1, %s6
  %s9 = scalar_select 0, %s8, %s6
  $region1: #{tpu_custom_call.1} parent=0
    #allocation3 [shape = 'u8[16384]{0}', space=vmem, size = 0x4000, scoped, tag = 'input window, operand 0, single buffered']
    #allocation4 [shape = 's32[1]{0}', space=sflag, size = 0x4, scoped, tag = 'scoped memory for tpu_custom_call.1']
    #allocation5 [shape = 's32[1]{0}', space=sflag, size = 0x4, scoped, tag = 'scoped memory for tpu_custom_call.1']
    #allocation6 [shape = 'u8[32768]{0}', space=vmem, size = 0x8000, scoped, tag = 'input window, operand 1, single buffered']
    #allocation7 [shape = 's32[1]{0}', space=sflag, size = 0x4, scoped, tag = 'scoped memory for tpu_custom_call.1']
    #allocation8 [shape = 'u8[32768]{0}', space=vmem, size = 0x8000, scoped, tag = 'input window, operand 2, single buffered']
    #allocation9 [shape = 'u8[65536]{0}', space=vmem, size = 0x10000, scoped, tag = 'input window, operand 3, single buffered']
    #allocation10 [shape = 's32[1]{0}', space=sflag, size = 0x4, scoped, tag = 'scoped memory for tpu_custom_call.1']
    #allocation11 [shape = 'u8[4096]{0}', space=vmem, size = 0x1000, scoped, tag = 'input window, operand 4, single buffered']
    #allocation12 [shape = 'u8[32768]{0}', space=vmem, size = 0x8000, scoped, tag = 'output window, operand 0, single buffered']
    %10 = vsyncpa [#allocation4], 0
    %11 = vsyncpa [#allocation7], 0
    %12 = vsyncpa [#allocation10], 0
    %13 = vsyncpa [#allocation5], 0
    // Predicated region
    $region2: #{tpu_custom_call.1} parent=1 // pred_check
      _
    $region3: #{tpu_custom_call.1} parent=1 // pred_check_branch
      %15 = sbr.rel (0) target = $region5
    $region4: #{tpu_custom_call.1} parent=1 // pred_region
      %17 = vsyncadd [#allocation4], 0
      %s18 = sshll.u32 %s0, 4
      %s19 = int_to_ptr.hbm [resolvable:$true] %s18
      %s20 = sshll.u32 [#allocation3], 4
      %s21 = int_to_ptr.vmem [resolvable:$true] %s20
      %26 = dma.hbm_to_vmem [thread:$0]  %s19, 512, %s21, [#allocation4], 128, 128, 8
    $region5: #{tpu_custom_call.1} parent=1 // pred_fallthru
      _
    // Predicated region
    $region6: #{tpu_custom_call.1} parent=1 // pred_check
      _
    $region7: #{tpu_custom_call.1} parent=1 // pred_check_branch
      %28 = sbr.rel (0) target = $region9
    $region8: #{tpu_custom_call.1} parent=1 // pred_region
      %30 = vsyncadd [#allocation7], 0
      %s31 = sshll.u32 %s1, 4
      %s32 = int_to_ptr.hbm [resolvable:$true] %s31
      %s33 = sshll.u32 [#allocation6], 4
      %s34 = int_to_ptr.vmem [resolvable:$true] %s33
      %39 = dma.hbm_to_vmem [thread:$0]  %s32, 1024, %s34, [#allocation7], 64, 64, 4
    $region9: #{tpu_custom_call.1} parent=1 // pred_fallthru
      _
    // Predicated region
    $region10: #{tpu_custom_call.1} parent=1 // pred_check
      _
    $region11: #{tpu_custom_call.1} parent=1 // pred_check_branch
      %41 = sbr.rel (0) target = $region13
    $region12: #{tpu_custom_call.1} parent=1 // pred_region
      %43 = vsyncadd [#allocation7], 0
      %s44 = sshll.u32 %s2, 4
      %s45 = int_to_ptr.hbm [resolvable:$true] %s44
      %s46 = sshll.u32 [#allocation8], 4
      %s47 = int_to_ptr.vmem [resolvable:$true] %s46
      %52 = dma.hbm_to_vmem [thread:$0]  %s45, 1024, %s47, [#allocation7], 64, 64, 4
    $region13: #{tpu_custom_call.1} parent=1 // pred_fallthru
      _
    // Predicated region
    $region14: #{tpu_custom_call.1} parent=1 // pred_check
      _
    $region15: #{tpu_custom_call.1} parent=1 // pred_check_branch
      %54 = sbr.rel (0) target = $region17
    $region16: #{tpu_custom_call.1} parent=1 // pred_region
      %56 = vsyncadd [#allocation10], 0
      %s57 = sshll.u32 %s3, 4
      %s58 = int_to_ptr.hbm [resolvable:$true] %s57
      %s59 = sshll.u32 [#allocation9], 4
      %s60 = int_to_ptr.vmem [resolvable:$true] %s59
      %65 = dma.hbm_to_vmem [thread:$0]  %s58, 2048, %s60, [#allocation10], 64, 64, 4
    $region17: #{tpu_custom_call.1} parent=1 // pred_fallthru
      _
    // Predicated region
    $region18: #{tpu_custom_call.1} parent=1 // pred_check
      _
    $region19: #{tpu_custom_call.1} parent=1 // pred_check_branch
      %67 = sbr.rel (0) target = $region21
    $region20: #{tpu_custom_call.1} parent=1 // pred_region
      %69 = vsyncadd [#allocation10], 0
      %s71 = sshll.u32 %s4, 4
      %s72 = int_to_ptr.hbm [resolvable:$true] %s71
      %s73 = sshll.u32 [#allocation11], 4
      %s74 = int_to_ptr.vmem [resolvable:$true] %s73
      %76 = dma.hbm_to_vmem [thread:$0]  %s72, 128, %s74, [#allocation10]
    $region21: #{tpu_custom_call.1} parent=1 // pred_fallthru
      _
    // Predicated region
    $region22: #{tpu_custom_call.1} parent=1 // pred_check
      _
    $region23: #{tpu_custom_call.1} parent=1 // pred_check_branch
      %78 = sbr.rel (0) target = $region25
    $region24: #{tpu_custom_call.1} parent=1 // pred_region
      %80 = dma.done [#allocation4], 512
    $region25: #{tpu_custom_call.1} parent=1 // pred_fallthru
      _
    // Predicated region
    $region26: #{tpu_custom_call.1} parent=1 // pred_check
      _
    $region27: #{tpu_custom_call.1} parent=1 // pred_check_branch
      %82 = sbr.rel (0) target = $region29
    $region28: #{tpu_custom_call.1} parent=1 // pred_region
      %84 = dma.done [#allocation7], 1024
    $region29: #{tpu_custom_call.1} parent=1 // pred_fallthru
      _
    // Predicated region
    $region30: #{tpu_custom_call.1} parent=1 // pred_check
      _
    $region31: #{tpu_custom_call.1} parent=1 // pred_check_branch
      %86 = sbr.rel (0) target = $region33
    $region32: #{tpu_custom_call.1} parent=1 // pred_region
      %88 = dma.done [#allocation7], 1024
    $region33: #{tpu_custom_call.1} parent=1 // pred_fallthru
      _
    // Predicated region
    $region34: #{tpu_custom_call.1} parent=1 // pred_check
      _
    $region35: #{tpu_custom_call.1} parent=1 // pred_check_branch
      %90 = sbr.rel (0) target = $region37
    $region36: #{tpu_custom_call.1} parent=1 // pred_region
      %92 = dma.done [#allocation10], 2048
    $region37: #{tpu_custom_call.1} parent=1 // pred_fallthru
      _
    // Predicated region
    $region38: #{tpu_custom_call.1} parent=1 // pred_check
      _
    $region39: #{tpu_custom_call.1} parent=1 // pred_check_branch
      %94 = sbr.rel (0) target = $region41
    $region40: #{tpu_custom_call.1} parent=1 // pred_region
      %96 = dma.done [#allocation10], 128
    $region41: #{tpu_custom_call.1} parent=1 // pred_fallthru
      _
    %p97 = scmp.eq.s32.totalorder 0, 0
    // Predicated region
    $region42: #{tpu_custom_call.1} parent=1 // pred_check
      %p98 = pneg %p97
    $region43: #{tpu_custom_call.1} parent=1 // pred_check_branch
      %100 = sbr.rel (%p98) target = $region45
    $region44: #{tpu_custom_call.1} parent=1 // pred_region
      %101 = vst [vmem:[#allocation2] sm:$0xff] 0.0
      %102 = vst [vmem:[#allocation2 + $0x8] sm:$0xff] 0.0
      %103 = vst [vmem:[#allocation2 + $0x10] sm:$0xff] 0.0
      %104 = vst [vmem:[#allocation2 + $0x18] sm:$0xff] 0.0
      %105 = vst [vmem:[#allocation2 + $0x20] sm:$0xff] 0.0
      %106 = vst [vmem:[#allocation2 + $0x28] sm:$0xff] 0.0
      %107 = vst [vmem:[#allocation2 + $0x30] sm:$0xff] 0.0
      %108 = vst [vmem:[#allocation2 + $0x38] sm:$0xff] 0.0
      %109 = vst [vmem:[#allocation2 + $0x40] sm:$0xff] 0.0
      %110 = vst [vmem:[#allocation2 + $0x48] sm:$0xff] 0.0
      %111 = vst [vmem:[#allocation2 + $0x50] sm:$0xff] 0.0
      %112 = vst [vmem:[#allocation2 + $0x58] sm:$0xff] 0.0
      %113 = vst [vmem:[#allocation2 + $0x60] sm:$0xff] 0.0
      %114 = vst [vmem:[#allocation2 + $0x68] sm:$0xff] 0.0
      %115 = vst [vmem:[#allocation2 + $0x70] sm:$0xff] 0.0
      %116 = vst [vmem:[#allocation2 + $0x78] sm:$0xff] 0.0
    $region45: #{tpu_custom_call.1} parent=1 // pred_fallthru
      _
    %v117 = vld [vmem:[#allocation2] sm:$0xff]
    %v118 = vld [vmem:[#allocation2 + $0x8] sm:$0xff]
    %v119 = vld [vmem:[#allocation2 + $0x10] sm:$0xff]
    %v120 = vld [vmem:[#allocation2 + $0x18] sm:$0xff]
    %v121 = vld [vmem:[#allocation2 + $0x20] sm:$0xff]
    %v122 = vld [vmem:[#allocation2 + $0x28] sm:$0xff]
    %v123 = vld [vmem:[#allocation2 + $0x30] sm:$0xff]
    %v124 = vld [vmem:[#allocation2 + $0x38] sm:$0xff]
    %v125 = vld [vmem:[#allocation2 + $0x40] sm:$0xff]
    %v126 = vld [vmem:[#allocation2 + $0x48] sm:$0xff]
    %v127 = vld [vmem:[#allocation2 + $0x50] sm:$0xff]
    %v128 = vld [vmem:[#allocation2 + $0x58] sm:$0xff]
    %v129 = vld [vmem:[#allocation2 + $0x60] sm:$0xff]
    %v130 = vld [vmem:[#allocation2 + $0x68] sm:$0xff]
    %v131 = vld [vmem:[#allocation2 + $0x70] sm:$0xff]
    %v132 = vld [vmem:[#allocation2 + $0x78] sm:$0xff]
    %v133 = vld [vmem:[#allocation3] sm:$0xff]
    %v134 = vld [vmem:[#allocation3 + $0x8] sm:$0xff]
    %v135 = vld [vmem:[#allocation3 + $0x10] sm:$0xff]
    %v136 = vld [vmem:[#allocation3 + $0x18] sm:$0xff]
    %v137 = vunpack.c.0.s8 %v133
    %v138 = vunpack.c.1.s8 %v133
    %v139 = vunpack.c.2.s8 %v133
    %v140 = vunpack.c.3.s8 %v133
    %v141 = vunpack.c.0.s8 %v134
    %v142 = vunpack.c.1.s8 %v134
    %v143 = vunpack.c.2.s8 %v134
    %v144 = vunpack.c.3.s8 %v134
    %v145 = vunpack.c.0.s8 %v135
    %v146 = vunpack.c.1.s8 %v135
    %v147 = vunpack.c.2.s8 %v135
    %v148 = vunpack.c.3.s8 %v135
    %v149 = vunpack.c.0.s8 %v136
    %v150 = vunpack.c.1.s8 %v136
    %v151 = vunpack.c.2.s8 %v136
    %v152 = vunpack.c.3.s8 %v136
    %v153 = vcvt.s32.f32 %v137
    %v154 = vcvt.s32.f32 %v138
    %v155 = vcvt.s32.f32 %v139
    %v156 = vcvt.s32.f32 %v140
    %v157 = vcvt.s32.f32 %v141
    %v158 = vcvt.s32.f32 %v142
    %v159 = vcvt.s32.f32 %v143
    %v160 = vcvt.s32.f32 %v144
    %v161 = vcvt.s32.f32 %v145
    %v162 = vcvt.s32.f32 %v146
    %v163 = vcvt.s32.f32 %v147
    %v164 = vcvt.s32.f32 %v148
    %v165 = vcvt.s32.f32 %v149
    %v166 = vcvt.s32.f32 %v150
    %v167 = vcvt.s32.f32 %v151
    %v168 = vcvt.s32.f32 %v152
    %v169 = vpack.c.bf16 %v154, %v153
    %v170 = vpack.c.bf16 %v156, %v155
    %v171 = vpack.c.bf16 %v158, %v157
    %v172 = vpack.c.bf16 %v160, %v159
    %v173 = vpack.c.bf16 %v162, %v161
    %v174 = vpack.c.bf16 %v164, %v163
    %v175 = vpack.c.bf16 %v166, %v165
    %v176 = vpack.c.bf16 %v168, %v167
    %s177 = smul.u32 0, 128
    %s178 = sshra.s32 %s177, 3
    %s179 = sand.u32 %s177, 7
    %s180 = smul.addr %s178, 4
    %s181 = scalar_lea.vmem [#allocation6], %s180
    %v182 = vld [vmem:[%s181] sm:$0xf]
    %v183 = vld [vmem:[%s181 + $0x4] sm:$0xf]
    %v184 = vld [vmem:[%s181 + $0x8] sm:$0xf]
    %v185 = vld [vmem:[%s181 + $0xc] sm:$0xf]
    %v186 = vld [vmem:[%s181 + $0x10] sm:$0xf]
    %v187 = vld [vmem:[%s181 + $0x14] sm:$0xf]
    %v188 = vld [vmem:[%s181 + $0x18] sm:$0xf]
    %v189 = vld [vmem:[%s181 + $0x1c] sm:$0xf]
    %v190 = vld [vmem:[%s181 + $0x20] sm:$0xf]
    %v191 = vld [vmem:[%s181 + $0x24] sm:$0xf]
    %v192 = vld [vmem:[%s181 + $0x28] sm:$0xf]
    %v193 = vld [vmem:[%s181 + $0x2c] sm:$0xf]
    %v194 = vld [vmem:[%s181 + $0x30] sm:$0xf]
    %v195 = vld [vmem:[%s181 + $0x34] sm:$0xf]
    %v196 = vld [vmem:[%s181 + $0x38] sm:$0xf]
    %v197 = vld [vmem:[%s181 + $0x3c] sm:$0xf]
    %v214 = vunpack.c.l.b16 %v182
    %v215 = vunpack.c.l.b16 %v183
    %v216 = vunpack.c.l.b16 %v184
    %v217 = vunpack.c.l.b16 %v185
    %v218 = vunpack.c.l.b16 %v186
    %v219 = vunpack.c.l.b16 %v187
    %v220 = vunpack.c.l.b16 %v188
    %v221 = vunpack.c.l.b16 %v189
    %v222 = vunpack.c.l.b16 %v190
    %v223 = vunpack.c.l.b16 %v191
    %v224 = vunpack.c.l.b16 %v192
    %v225 = vunpack.c.l.b16 %v193
    %v226 = vunpack.c.l.b16 %v194
    %v227 = vunpack.c.l.b16 %v195
    %v228 = vunpack.c.l.b16 %v196
    %v229 = vunpack.c.l.b16 %v197
    %v230 = vpack.c.b16 %v215, %v214
    %v231 = vpack.c.b16 %v217, %v216
    %v232 = vpack.c.b16 %v219, %v218
    %v233 = vpack.c.b16 %v221, %v220
    %v234 = vpack.c.b16 %v223, %v222
    %v235 = vpack.c.b16 %v225, %v224
    %v236 = vpack.c.b16 %v227, %v226
    %v237 = vpack.c.b16 %v229, %v228
    %246 = vmatpush.bf16.msra.mxu0 %v237
    %247 = vmatpush.bf16.msra.mxu0 %v236
    %248 = vmatpush.bf16.msra.mxu0 %v235
    %249 = vmatpush.bf16.msra.mxu0 %v234
    %250 = vmatpush.bf16.msra.mxu0 %v233
    %251 = vmatpush.bf16.msra.mxu0 %v232
    %252 = vmatpush.bf16.msra.mxu0 %v231
    %253 = vmatpush.bf16.msra.mxu0 %v230
    %254 = vmatmul.bf16.gmra.mxu0 %v169
    %v255 = vpop.f32.mrf.mxu0
    %v256 = vadd.f32 0.0, %v255
    %v257 = vpop.f32.mrf.mxu0
    %v258 = vadd.f32 0.0, %v257
    %259 = vmatmul.bf16.gmra.mxu0 %v170
    %v260 = vpop.f32.mrf.mxu0
    %v261 = vadd.f32 0.0, %v260
    %v262 = vpop.f32.mrf.mxu0
    %v263 = vadd.f32 0.0, %v262
    %264 = vmatmul.bf16.gmra.mxu0 %v171
    %v265 = vpop.f32.mrf.mxu0
    %v266 = vadd.f32 0.0, %v265
    %v267 = vpop.f32.mrf.mxu0
    %v268 = vadd.f32 0.0, %v267
    %269 = vmatmul.bf16.gmra.mxu0 %v172
    %v270 = vpop.f32.mrf.mxu0
    %v271 = vadd.f32 0.0, %v270
    %v272 = vpop.f32.mrf.mxu0
    %v273 = vadd.f32 0.0, %v272
    %274 = vmatmul.bf16.gmra.mxu0 %v173
    %v275 = vpop.f32.mrf.mxu0
    %v276 = vadd.f32 0.0, %v275
    %v277 = vpop.f32.mrf.mxu0
    %v278 = vadd.f32 0.0, %v277
    %279 = vmatmul.bf16.gmra.mxu0 %v174
    %v280 = vpop.f32.mrf.mxu0
    %v281 = vadd.f32 0.0, %v280
    %v282 = vpop.f32.mrf.mxu0
    %v283 = vadd.f32 0.0, %v282
    %284 = vmatmul.bf16.gmra.mxu0 %v175
    %v285 = vpop.f32.mrf.mxu0
    %v286 = vadd.f32 0.0, %v285
    %v287 = vpop.f32.mrf.mxu0
    %v288 = vadd.f32 0.0, %v287
    %289 = vmatmul.bf16.gmra.mxu0 %v176
    %v290 = vpop.f32.mrf.mxu0
    %v291 = vadd.f32 0.0, %v290
    %v292 = vpop.f32.mrf.mxu0
    %v293 = vadd.f32 0.0, %v292
    %294 = vdwg.mxu0
    %v295 = vadd.f32 %v117, %v256
    %v296 = vadd.f32 %v118, %v258
    %v297 = vadd.f32 %v119, %v261
    %v298 = vadd.f32 %v120, %v263
    %v299 = vadd.f32 %v121, %v266
    %v300 = vadd.f32 %v122, %v268
    %v301 = vadd.f32 %v123, %v271
    %v302 = vadd.f32 %v124, %v273
    %v303 = vadd.f32 %v125, %v276
    %v304 = vadd.f32 %v126, %v278
    %v305 = vadd.f32 %v127, %v281
    %v306 = vadd.f32 %v128, %v283
    %v307 = vadd.f32 %v129, %v286
    %v308 = vadd.f32 %v130, %v288
    %v309 = vadd.f32 %v131, %v291
    %v310 = vadd.f32 %v132, %v293
    %311 = vst [vmem:[#allocation2] sm:$0xff] %v295
    %312 = vst [vmem:[#allocation2 + $0x8] sm:$0xff] %v296
    %313 = vst [vmem:[#allocation2 + $0x10] sm:$0xff] %v297
    %314 = vst [vmem:[#allocation2 + $0x18] sm:$0xff] %v298
    %315 = vst [vmem:[#allocation2 + $0x20] sm:$0xff] %v299
    %316 = vst [vmem:[#allocation2 + $0x28] sm:$0xff] %v300
    %317 = vst [vmem:[#allocation2 + $0x30] sm:$0xff] %v301
    %318 = vst [vmem:[#allocation2 + $0x38] sm:$0xff] %v302
    %319 = vst [vmem:[#allocation2 + $0x40] sm:$0xff] %v303
    %320 = vst [vmem:[#allocation2 + $0x48] sm:$0xff] %v304
    %321 = vst [vmem:[#allocation2 + $0x50] sm:$0xff] %v305
    %322 = vst [vmem:[#allocation2 + $0x58] sm:$0xff] %v306
    %323 = vst [vmem:[#allocation2 + $0x60] sm:$0xff] %v307
    %324 = vst [vmem:[#allocation2 + $0x68] sm:$0xff] %v308
    %325 = vst [vmem:[#allocation2 + $0x70] sm:$0xff] %v309
    %326 = vst [vmem:[#allocation2 + $0x78] sm:$0xff] %v310
    // Predicated region
    $region46: #{tpu_custom_call.1} parent=1 // pred_check
      %p327 = pneg %p97
    $region47: #{tpu_custom_call.1} parent=1 // pred_check_branch
      %329 = sbr.rel (%p327) target = $region49
    $region48: #{tpu_custom_call.1} parent=1 // pred_region
      %v330 = vld [vmem:[#allocation2] sm:$0xff]
      %v331 = vld [vmem:[#allocation2 + $0x8] sm:$0xff]
      %v332 = vld [vmem:[#allocation2 + $0x10] sm:$0xff]
      %v333 = vld [vmem:[#allocation2 + $0x18] sm:$0xff]
      %v334 = vld [vmem:[#allocation2 + $0x20] sm:$0xff]
      %v335 = vld [vmem:[#allocation2 + $0x28] sm:$0xff]
      %v336 = vld [vmem:[#allocation2 + $0x30] sm:$0xff]
      %v337 = vld [vmem:[#allocation2 + $0x38] sm:$0xff]
      %v338 = vld [vmem:[#allocation2 + $0x40] sm:$0xff]
      %v339 = vld [vmem:[#allocation2 + $0x48] sm:$0xff]
      %v340 = vld [vmem:[#allocation2 + $0x50] sm:$0xff]
      %v341 = vld [vmem:[#allocation2 + $0x58] sm:$0xff]
      %v342 = vld [vmem:[#allocation2 + $0x60] sm:$0xff]
      %v343 = vld [vmem:[#allocation2 + $0x68] sm:$0xff]
      %v344 = vld [vmem:[#allocation2 + $0x70] sm:$0xff]
      %v345 = vld [vmem:[#allocation2 + $0x78] sm:$0xff]
      %v346 = vpack.c.bf16 %v331, %v330
      %v347 = vpack.c.bf16 %v333, %v332
      %v348 = vpack.c.bf16 %v335, %v334
      %v349 = vpack.c.bf16 %v337, %v336
      %v350 = vpack.c.bf16 %v339, %v338
      %v351 = vpack.c.bf16 %v341, %v340
      %v352 = vpack.c.bf16 %v343, %v342
      %v353 = vpack.c.bf16 %v345, %v344
      %v354 = vld [vmem:[#allocation9] sm:$0xf]
      %v355 = vld [vmem:[#allocation9 + $0x4] sm:$0xf]
      %v356 = vld [vmem:[#allocation9 + $0x8] sm:$0xf]
      %v357 = vld [vmem:[#allocation9 + $0xc] sm:$0xf]
      %v358 = vld [vmem:[#allocation9 + $0x10] sm:$0xf]
      %v359 = vld [vmem:[#allocation9 + $0x14] sm:$0xf]
      %v360 = vld [vmem:[#allocation9 + $0x18] sm:$0xf]
      %v361 = vld [vmem:[#allocation9 + $0x1c] sm:$0xf]
      %v362 = vld [vmem:[#allocation9 + $0x20] sm:$0xf]
      %v363 = vld [vmem:[#allocation9 + $0x24] sm:$0xf]
      %v364 = vld [vmem:[#allocation9 + $0x28] sm:$0xf]
      %v365 = vld [vmem:[#allocation9 + $0x2c] sm:$0xf]
      %v366 = vld [vmem:[#allocation9 + $0x30] sm:$0xf]
      %v367 = vld [vmem:[#allocation9 + $0x34] sm:$0xf]
      %v368 = vld [vmem:[#allocation9 + $0x38] sm:$0xf]
      %v369 = vld [vmem:[#allocation9 + $0x3c] sm:$0xf]
      %v370 = vld [vmem:[#allocation8] sm:$0xf]
      %v371 = vld [vmem:[#allocation8 + $0x4] sm:$0xf]
      %v372 = vld [vmem:[#allocation8 + $0x8] sm:$0xf]
      %v373 = vld [vmem:[#allocation8 + $0xc] sm:$0xf]
      %v374 = vld [vmem:[#allocation8 + $0x10] sm:$0xf]
      %v375 = vld [vmem:[#allocation8 + $0x14] sm:$0xf]
      %v376 = vld [vmem:[#allocation8 + $0x18] sm:$0xf]
      %v377 = vld [vmem:[#allocation8 + $0x1c] sm:$0xf]
      %v378 = vld [vmem:[#allocation8 + $0x20] sm:$0xf]
      %v379 = vld [vmem:[#allocation8 + $0x24] sm:$0xf]
      %v380 = vld [vmem:[#allocation8 + $0x28] sm:$0xf]
      %v381 = vld [vmem:[#allocation8 + $0x2c] sm:$0xf]
      %v382 = vld [vmem:[#allocation8 + $0x30] sm:$0xf]
      %v383 = vld [vmem:[#allocation8 + $0x34] sm:$0xf]
      %v384 = vld [vmem:[#allocation8 + $0x38] sm:$0xf]
      %v385 = vld [vmem:[#allocation8 + $0x3c] sm:$0xf]
      %v386 = vld [vmem:[#allocation9 + $0x40] sm:$0xf]
      %v387 = vld [vmem:[#allocation9 + $0x44] sm:$0xf]
      %v388 = vld [vmem:[#allocation9 + $0x48] sm:$0xf]
      %v389 = vld [vmem:[#allocation9 + $0x4c] sm:$0xf]
      %v390 = vld [vmem:[#allocation9 + $0x50] sm:$0xf]
      %v391 = vld [vmem:[#allocation9 + $0x54] sm:$0xf]
      %v392 = vld [vmem:[#allocation9 + $0x58] sm:$0xf]
      %v393 = vld [vmem:[#allocation9 + $0x5c] sm:$0xf]
      %v394 = vld [vmem:[#allocation9 + $0x60] sm:$0xf]
      %v395 = vld [vmem:[#allocation9 + $0x64] sm:$0xf]
      %v396 = vld [vmem:[#allocation9 + $0x68] sm:$0xf]
      %v397 = vld [vmem:[#allocation9 + $0x6c] sm:$0xf]
      %v398 = vld [vmem:[#allocation9 + $0x70] sm:$0xf]
      %v399 = vld [vmem:[#allocation9 + $0x74] sm:$0xf]
      %v400 = vld [vmem:[#allocation9 + $0x78] sm:$0xf]
      %v401 = vld [vmem:[#allocation9 + $0x7c] sm:$0xf]
      %v418 = vunpack.c.l.b16 %v370
      %v419 = vunpack.c.l.b16 %v371
      %v420 = vunpack.c.l.b16 %v372
      %v421 = vunpack.c.l.b16 %v373
      %v422 = vunpack.c.l.b16 %v374
      %v423 = vunpack.c.l.b16 %v375
      %v424 = vunpack.c.l.b16 %v376
      %v425 = vunpack.c.l.b16 %v377
      %v426 = vunpack.c.l.b16 %v378
      %v427 = vunpack.c.l.b16 %v379
      %v428 = vunpack.c.l.b16 %v380
      %v429 = vunpack.c.l.b16 %v381
      %v430 = vunpack.c.l.b16 %v382
      %v431 = vunpack.c.l.b16 %v383
      %v432 = vunpack.c.l.b16 %v384
      %v433 = vunpack.c.l.b16 %v385
      %v434 = vpack.c.b16 %v419, %v418
      %v435 = vpack.c.b16 %v421, %v420
      %v436 = vpack.c.b16 %v423, %v422
      %v437 = vpack.c.b16 %v425, %v424
      %v438 = vpack.c.b16 %v427, %v426
      %v439 = vpack.c.b16 %v429, %v428
      %v440 = vpack.c.b16 %v431, %v430
      %v441 = vpack.c.b16 %v433, %v432
      %v466 = vunpack.c.l.b16 %v386
      %v467 = vunpack.c.l.b16 %v387
      %v468 = vunpack.c.l.b16 %v388
      %v469 = vunpack.c.l.b16 %v389
      %v470 = vunpack.c.l.b16 %v390
      %v471 = vunpack.c.l.b16 %v391
      %v472 = vunpack.c.l.b16 %v392
      %v473 = vunpack.c.l.b16 %v393
      %v474 = vunpack.c.l.b16 %v394
      %v475 = vunpack.c.l.b16 %v395
      %v476 = vunpack.c.l.b16 %v396
      %v477 = vunpack.c.l.b16 %v397
      %v478 = vunpack.c.l.b16 %v398
      %v479 = vunpack.c.l.b16 %v399
      %v480 = vunpack.c.l.b16 %v400
      %v481 = vunpack.c.l.b16 %v401
      %v482 = vpack.c.b16 %v467, %v466
      %v483 = vpack.c.b16 %v469, %v468
      %v484 = vpack.c.b16 %v471, %v470
      %v485 = vpack.c.b16 %v473, %v472
      %v486 = vpack.c.b16 %v475, %v474
      %v487 = vpack.c.b16 %v477, %v476
      %v488 = vpack.c.b16 %v479, %v478
      %v489 = vpack.c.b16 %v481, %v480
      %498 = vmatpush.bf16.msra.mxu0 %v489
      %499 = vmatpush.bf16.msra.mxu0 %v488
      %500 = vmatpush.bf16.msra.mxu0 %v487
      %501 = vmatpush.bf16.msra.mxu0 %v486
      %502 = vmatpush.bf16.msra.mxu0 %v485
      %503 = vmatpush.bf16.msra.mxu0 %v484
      %504 = vmatpush.bf16.msra.mxu0 %v483
      %505 = vmatpush.bf16.msra.mxu0 %v482
      %506 = vmatmul.bf16.gmra.mxu0 %v434
      %v507 = vpop.f32.mrf.mxu0
      %v508 = vadd.f32 0.0, %v507
      %v509 = vpop.f32.mrf.mxu0
      %v510 = vadd.f32 0.0, %v509
      %511 = vmatmul.bf16.gmra.mxu0 %v435
      %v512 = vpop.f32.mrf.mxu0
      %v513 = vadd.f32 0.0, %v512
      %v514 = vpop.f32.mrf.mxu0
      %v515 = vadd.f32 0.0, %v514
      %516 = vmatmul.bf16.gmra.mxu0 %v436
      %v517 = vpop.f32.mrf.mxu0
      %v518 = vadd.f32 0.0, %v517
      %v519 = vpop.f32.mrf.mxu0
      %v520 = vadd.f32 0.0, %v519
      %521 = vmatmul.bf16.gmra.mxu0 %v437
      %v522 = vpop.f32.mrf.mxu0
      %v523 = vadd.f32 0.0, %v522
      %v524 = vpop.f32.mrf.mxu0
      %v525 = vadd.f32 0.0, %v524
      %526 = vmatmul.bf16.gmra.mxu0 %v438
      %v527 = vpop.f32.mrf.mxu0
      %v528 = vadd.f32 0.0, %v527
      %v529 = vpop.f32.mrf.mxu0
      %v530 = vadd.f32 0.0, %v529
      %531 = vmatmul.bf16.gmra.mxu0 %v439
      %v532 = vpop.f32.mrf.mxu0
      %v533 = vadd.f32 0.0, %v532
      %v534 = vpop.f32.mrf.mxu0
      %v535 = vadd.f32 0.0, %v534
      %536 = vmatmul.bf16.gmra.mxu0 %v440
      %v537 = vpop.f32.mrf.mxu0
      %v538 = vadd.f32 0.0, %v537
      %v539 = vpop.f32.mrf.mxu0
      %v540 = vadd.f32 0.0, %v539
      %541 = vmatmul.bf16.gmra.mxu0 %v441
      %v542 = vpop.f32.mrf.mxu0
      %v543 = vadd.f32 0.0, %v542
      %v544 = vpop.f32.mrf.mxu0
      %v545 = vadd.f32 0.0, %v544
      %546 = vdwg.mxu0
      %v563 = vunpack.c.l.b16 %v354
      %v564 = vunpack.c.l.b16 %v355
      %v565 = vunpack.c.l.b16 %v356
      %v566 = vunpack.c.l.b16 %v357
      %v567 = vunpack.c.l.b16 %v358
      %v568 = vunpack.c.l.b16 %v359
      %v569 = vunpack.c.l.b16 %v360
      %v570 = vunpack.c.l.b16 %v361
      %v571 = vunpack.c.l.b16 %v362
      %v572 = vunpack.c.l.b16 %v363
      %v573 = vunpack.c.l.b16 %v364
      %v574 = vunpack.c.l.b16 %v365
      %v575 = vunpack.c.l.b16 %v366
      %v576 = vunpack.c.l.b16 %v367
      %v577 = vunpack.c.l.b16 %v368
      %v578 = vunpack.c.l.b16 %v369
      %v579 = vpack.c.b16 %v564, %v563
      %v580 = vpack.c.b16 %v566, %v565
      %v581 = vpack.c.b16 %v568, %v567
      %v582 = vpack.c.b16 %v570, %v569
      %v583 = vpack.c.b16 %v572, %v571
      %v584 = vpack.c.b16 %v574, %v573
      %v585 = vpack.c.b16 %v576, %v575
      %v586 = vpack.c.b16 %v578, %v577
      %595 = vmatpush.bf16.msra.mxu0 %v586
      %596 = vmatpush.bf16.msra.mxu0 %v585
      %597 = vmatpush.bf16.msra.mxu0 %v584
      %598 = vmatpush.bf16.msra.mxu0 %v583
      %599 = vmatpush.bf16.msra.mxu0 %v582
      %600 = vmatpush.bf16.msra.mxu0 %v581
      %601 = vmatpush.bf16.msra.mxu0 %v580
      %602 = vmatpush.bf16.msra.mxu0 %v579
      %603 = vmatmul.bf16.gmra.mxu0 %v346
      %v604 = vpop.f32.mrf.mxu0
      %v605 = vadd.f32 %v508, %v604
      %v606 = vpop.f32.mrf.mxu0
      %v607 = vadd.f32 %v510, %v606
      %608 = vmatmul.bf16.gmra.mxu0 %v347
      %v609 = vpop.f32.mrf.mxu0
      %v610 = vadd.f32 %v513, %v609
      %v611 = vpop.f32.mrf.mxu0
      %v612 = vadd.f32 %v515, %v611
      %613 = vmatmul.bf16.gmra.mxu0 %v348
      %v614 = vpop.f32.mrf.mxu0
      %v615 = vadd.f32 %v518, %v614
      %v616 = vpop.f32.mrf.mxu0
      %v617 = vadd.f32 %v520, %v616
      %618 = vmatmul.bf16.gmra.mxu0 %v349
      %v619 = vpop.f32.mrf.mxu0
      %v620 = vadd.f32 %v523, %v619
      %v621 = vpop.f32.mrf.mxu0
      %v622 = vadd.f32 %v525, %v621
      %623 = vmatmul.bf16.gmra.mxu0 %v350
      %v624 = vpop.f32.mrf.mxu0
      %v625 = vadd.f32 %v528, %v624
      %v626 = vpop.f32.mrf.mxu0
      %v627 = vadd.f32 %v530, %v626
      %628 = vmatmul.bf16.gmra.mxu0 %v351
      %v629 = vpop.f32.mrf.mxu0
      %v630 = vadd.f32 %v533, %v629
      %v631 = vpop.f32.mrf.mxu0
      %v632 = vadd.f32 %v535, %v631
      %633 = vmatmul.bf16.gmra.mxu0 %v352
      %v634 = vpop.f32.mrf.mxu0
      %v635 = vadd.f32 %v538, %v634
      %v636 = vpop.f32.mrf.mxu0
      %v637 = vadd.f32 %v540, %v636
      %638 = vmatmul.bf16.gmra.mxu0 %v353
      %v639 = vpop.f32.mrf.mxu0
      %v640 = vadd.f32 %v543, %v639
      %v641 = vpop.f32.mrf.mxu0
      %v642 = vadd.f32 %v545, %v641
      %643 = vdwg.mxu0
      %v644 = vld [vmem:[#allocation11] sm:$0x1]
      %v645 = vperm.slane %v644, 0
      %v646 = vadd.f32 %v605, %v645
      %v647 = vadd.f32 %v607, %v645
      %v648 = vadd.f32 %v610, %v645
      %v649 = vadd.f32 %v612, %v645
      %v650 = vadd.f32 %v615, %v645
      %v651 = vadd.f32 %v617, %v645
      %v652 = vadd.f32 %v620, %v645
      %v653 = vadd.f32 %v622, %v645
      %v654 = vadd.f32 %v625, %v645
      %v655 = vadd.f32 %v627, %v645
      %v656 = vadd.f32 %v630, %v645
      %v657 = vadd.f32 %v632, %v645
      %v658 = vadd.f32 %v635, %v645
      %v659 = vadd.f32 %v637, %v645
      %v660 = vadd.f32 %v640, %v645
      %v661 = vadd.f32 %v642, %v645
      %662 = vadd.xlane.f32.xlu0 %v646
      %v663 = vpop.xlane.xlu0 %662
      %664 = vadd.xlane.f32.xlu0 %v647
      %v665 = vpop.xlane.xlu0 %664
      %666 = vadd.xlane.f32.xlu0 %v648
      %v667 = vpop.xlane.xlu0 %666
      %668 = vadd.xlane.f32.xlu0 %v649
      %v669 = vpop.xlane.xlu0 %668
      %670 = vadd.xlane.f32.xlu0 %v650
      %v671 = vpop.xlane.xlu0 %670
      %672 = vadd.xlane.f32.xlu0 %v651
      %v673 = vpop.xlane.xlu0 %672
      %674 = vadd.xlane.f32.xlu0 %v652
      %v675 = vpop.xlane.xlu0 %674
      %676 = vadd.xlane.f32.xlu0 %v653
      %v677 = vpop.xlane.xlu0 %676
      %678 = vadd.xlane.f32.xlu0 %v654
      %v679 = vpop.xlane.xlu0 %678
      %680 = vadd.xlane.f32.xlu0 %v655
      %v681 = vpop.xlane.xlu0 %680
      %682 = vadd.xlane.f32.xlu0 %v656
      %v683 = vpop.xlane.xlu0 %682
      %684 = vadd.xlane.f32.xlu0 %v657
      %v685 = vpop.xlane.xlu0 %684
      %686 = vadd.xlane.f32.xlu0 %v658
      %v687 = vpop.xlane.xlu0 %686
      %688 = vadd.xlane.f32.xlu0 %v659
      %v689 = vpop.xlane.xlu0 %688
      %690 = vadd.xlane.f32.xlu0 %v660
      %v691 = vpop.xlane.xlu0 %690
      %692 = vadd.xlane.f32.xlu0 %v661
      %v693 = vpop.xlane.xlu0 %692
      %v694 = vmul.f32 %v646, %v646
      %v695 = vmul.f32 %v647, %v647
      %v696 = vmul.f32 %v648, %v648
      %v697 = vmul.f32 %v649, %v649
      %v698 = vmul.f32 %v650, %v650
      %v699 = vmul.f32 %v651, %v651
      %v700 = vmul.f32 %v652, %v652
      %v701 = vmul.f32 %v653, %v653
      %v702 = vmul.f32 %v654, %v654
      %v703 = vmul.f32 %v655, %v655
      %v704 = vmul.f32 %v656, %v656
      %v705 = vmul.f32 %v657, %v657
      %v706 = vmul.f32 %v658, %v658
      %v707 = vmul.f32 %v659, %v659
      %v708 = vmul.f32 %v660, %v660
      %v709 = vmul.f32 %v661, %v661
      %710 = vadd.xlane.f32.xlu0 %v694
      %v711 = vpop.xlane.xlu0 %710
      %712 = vadd.xlane.f32.xlu0 %v695
      %v713 = vpop.xlane.xlu0 %712
      %714 = vadd.xlane.f32.xlu0 %v696
      %v715 = vpop.xlane.xlu0 %714
      %716 = vadd.xlane.f32.xlu0 %v697
      %v717 = vpop.xlane.xlu0 %716
      %718 = vadd.xlane.f32.xlu0 %v698
      %v719 = vpop.xlane.xlu0 %718
      %720 = vadd.xlane.f32.xlu0 %v699
      %v721 = vpop.xlane.xlu0 %720
      %722 = vadd.xlane.f32.xlu0 %v700
      %v723 = vpop.xlane.xlu0 %722
      %724 = vadd.xlane.f32.xlu0 %v701
      %v725 = vpop.xlane.xlu0 %724
      %726 = vadd.xlane.f32.xlu0 %v702
      %v727 = vpop.xlane.xlu0 %726
      %728 = vadd.xlane.f32.xlu0 %v703
      %v729 = vpop.xlane.xlu0 %728
      %730 = vadd.xlane.f32.xlu0 %v704
      %v731 = vpop.xlane.xlu0 %730
      %732 = vadd.xlane.f32.xlu0 %v705
      %v733 = vpop.xlane.xlu0 %732
      %734 = vadd.xlane.f32.xlu0 %v706
      %v735 = vpop.xlane.xlu0 %734
      %736 = vadd.xlane.f32.xlu0 %v707
      %v737 = vpop.xlane.xlu0 %736
      %738 = vadd.xlane.f32.xlu0 %v708
      %v739 = vpop.xlane.xlu0 %738
      %740 = vadd.xlane.f32.xlu0 %v709
      %v741 = vpop.xlane.xlu0 %740
      %v742 = vmul.f32 %v663, 0.03125
      %v743 = vmul.f32 %v665, 0.03125
      %v744 = vmul.f32 %v667, 0.03125
      %v745 = vmul.f32 %v669, 0.03125
      %v746 = vmul.f32 %v671, 0.03125
      %v747 = vmul.f32 %v673, 0.03125
      %v748 = vmul.f32 %v675, 0.03125
      %v749 = vmul.f32 %v677, 0.03125
      %v750 = vmul.f32 %v679, 0.03125
      %v751 = vmul.f32 %v681, 0.03125
      %v752 = vmul.f32 %v683, 0.03125
      %v753 = vmul.f32 %v685, 0.03125
      %v754 = vmul.f32 %v687, 0.03125
      %v755 = vmul.f32 %v689, 0.03125
      %v756 = vmul.f32 %v691, 0.03125
      %v757 = vmul.f32 %v693, 0.03125
      %v758 = vmul.f32 %v711, 0.03125
      %v759 = vmul.f32 %v713, 0.03125
      %v760 = vmul.f32 %v715, 0.03125
      %v761 = vmul.f32 %v717, 0.03125
      %v762 = vmul.f32 %v719, 0.03125
      %v763 = vmul.f32 %v721, 0.03125
      %v764 = vmul.f32 %v723, 0.03125
      %v765 = vmul.f32 %v725, 0.03125
      %v766 = vmul.f32 %v727, 0.03125
      %v767 = vmul.f32 %v729, 0.03125
      %v768 = vmul.f32 %v731, 0.03125
      %v769 = vmul.f32 %v733, 0.03125
      %v770 = vmul.f32 %v735, 0.03125
      %v771 = vmul.f32 %v737, 0.03125
      %v772 = vmul.f32 %v739, 0.03125
      %v773 = vmul.f32 %v741, 0.03125
      %v774 = vmul.f32 %v742, %v742
      %v775 = vmul.f32 %v743, %v743
      %v776 = vmul.f32 %v744, %v744
      %v777 = vmul.f32 %v745, %v745
      %v778 = vmul.f32 %v746, %v746
      %v779 = vmul.f32 %v747, %v747
      %v780 = vmul.f32 %v748, %v748
      %v781 = vmul.f32 %v749, %v749
      %v782 = vmul.f32 %v750, %v750
      %v783 = vmul.f32 %v751, %v751
      %v784 = vmul.f32 %v752, %v752
      %v785 = vmul.f32 %v753, %v753
      %v786 = vmul.f32 %v754, %v754
      %v787 = vmul.f32 %v755, %v755
      %v788 = vmul.f32 %v756, %v756
      %v789 = vmul.f32 %v757, %v757
      %v790 = vsub.f32 %v758, %v774
      %v791 = vsub.f32 %v759, %v775
      %v792 = vsub.f32 %v760, %v776
      %v793 = vsub.f32 %v761, %v777
      %v794 = vsub.f32 %v762, %v778
      %v795 = vsub.f32 %v763, %v779
      %v796 = vsub.f32 %v764, %v780
      %v797 = vsub.f32 %v765, %v781
      %v798 = vsub.f32 %v766, %v782
      %v799 = vsub.f32 %v767, %v783
      %v800 = vsub.f32 %v768, %v784
      %v801 = vsub.f32 %v769, %v785
      %v802 = vsub.f32 %v770, %v786
      %v803 = vsub.f32 %v771, %v787
      %v804 = vsub.f32 %v772, %v788
      %v805 = vsub.f32 %v773, %v789
      %v806 = vmax.f32 %v790, 0.0
      %v807 = vmax.f32 %v791, 0.0
      %v808 = vmax.f32 %v792, 0.0
      %v809 = vmax.f32 %v793, 0.0
      %v810 = vmax.f32 %v794, 0.0
      %v811 = vmax.f32 %v795, 0.0
      %v812 = vmax.f32 %v796, 0.0
      %v813 = vmax.f32 %v797, 0.0
      %v814 = vmax.f32 %v798, 0.0
      %v815 = vmax.f32 %v799, 0.0
      %v816 = vmax.f32 %v800, 0.0
      %v817 = vmax.f32 %v801, 0.0
      %v818 = vmax.f32 %v802, 0.0
      %v819 = vmax.f32 %v803, 0.0
      %v820 = vmax.f32 %v804, 0.0
      %v821 = vmax.f32 %v805, 0.0
      %v822 = vsub.f32 %v646, %v742
      %v823 = vsub.f32 %v647, %v743
      %v824 = vsub.f32 %v648, %v744
      %v825 = vsub.f32 %v649, %v745
      %v826 = vsub.f32 %v650, %v746
      %v827 = vsub.f32 %v651, %v747
      %v828 = vsub.f32 %v652, %v748
      %v829 = vsub.f32 %v653, %v749
      %v830 = vsub.f32 %v654, %v750
      %v831 = vsub.f32 %v655, %v751
      %v832 = vsub.f32 %v656, %v752
      %v833 = vsub.f32 %v657, %v753
      %v834 = vsub.f32 %v658, %v754
      %v835 = vsub.f32 %v659, %v755
      %v836 = vsub.f32 %v660, %v756
      %v837 = vsub.f32 %v661, %v757
      %v838 = vadd.f32 %v806, 1e-05
      %v839 = vadd.f32 %v807, 1e-05
      %v840 = vadd.f32 %v808, 1e-05
      %v841 = vadd.f32 %v809, 1e-05
      %v842 = vadd.f32 %v810, 1e-05
      %v843 = vadd.f32 %v811, 1e-05
      %v844 = vadd.f32 %v812, 1e-05
      %v845 = vadd.f32 %v813, 1e-05
      %v846 = vadd.f32 %v814, 1e-05
      %v847 = vadd.f32 %v815, 1e-05
      %v848 = vadd.f32 %v816, 1e-05
      %v849 = vadd.f32 %v817, 1e-05
      %v850 = vadd.f32 %v818, 1e-05
      %v851 = vadd.f32 %v819, 1e-05
      %v852 = vadd.f32 %v820, 1e-05
      %v853 = vadd.f32 %v821, 1e-05
      %v854 = vrsqrt.pop %v838
      %v855 = vmul.f32 %v854, %v838
      %v856 = vmul.f32 %v855, %v854
      %v857 = vmul.f32 0.5, %v856
      %v858 = vsub.f32 1.5, %v857
      %v859 = vmul.f32 %v854, %v858
      %vm860 = vweird.f32 %v838
      %vm861 = vweird.f32 %v854
      %vm862 = vmor %vm860, %vm861
      %v863 = vsel %vm862, %v854, %v859
      %v864 = vrsqrt.pop %v839
      %v865 = vmul.f32 %v864, %v839
      %v866 = vmul.f32 %v865, %v864
      %v867 = vmul.f32 0.5, %v866
      %v868 = vsub.f32 1.5, %v867
      %v869 = vmul.f32 %v864, %v868
      %vm870 = vweird.f32 %v839
      %vm871 = vweird.f32 %v864
      %vm872 = vmor %vm870, %vm871
      %v873 = vsel %vm872, %v864, %v869
      %v874 = vrsqrt.pop %v840
      %v875 = vmul.f32 %v874, %v840
      %v876 = vmul.f32 %v875, %v874
      %v877 = vmul.f32 0.5, %v876
      %v878 = vsub.f32 1.5, %v877
      %v879 = vmul.f32 %v874, %v878
      %vm880 = vweird.f32 %v840
      %vm881 = vweird.f32 %v874
      %vm882 = vmor %vm880, %vm881
      %v883 = vsel %vm882, %v874, %v879
      %v884 = vrsqrt.pop %v841
      %v885 = vmul.f32 %v884, %v841
      %v886 = vmul.f32 %v885, %v884
      %v887 = vmul.f32 0.5, %v886
      %v888 = vsub.f32 1.5, %v887
      %v889 = vmul.f32 %v884, %v888
      %vm890 = vweird.f32 %v841
      %vm891 = vweird.f32 %v884
      %vm892 = vmor %vm890, %vm891
      %v893 = vsel %vm892, %v884, %v889
      %v894 = vrsqrt.pop %v842
      %v895 = vmul.f32 %v894, %v842
      %v896 = vmul.f32 %v895, %v894
      %v897 = vmul.f32 0.5, %v896
      %v898 = vsub.f32 1.5, %v897
      %v899 = vmul.f32 %v894, %v898
      %vm900 = vweird.f32 %v842
      %vm901 = vweird.f32 %v894
      %vm902 = vmor %vm900, %vm901
      %v903 = vsel %vm902, %v894, %v899
      %v904 = vrsqrt.pop %v843
      %v905 = vmul.f32 %v904, %v843
      %v906 = vmul.f32 %v905, %v904
      %v907 = vmul.f32 0.5, %v906
      %v908 = vsub.f32 1.5, %v907
      %v909 = vmul.f32 %v904, %v908
      %vm910 = vweird.f32 %v843
      %vm911 = vweird.f32 %v904
      %vm912 = vmor %vm910, %vm911
      %v913 = vsel %vm912, %v904, %v909
      %v914 = vrsqrt.pop %v844
      %v915 = vmul.f32 %v914, %v844
      %v916 = vmul.f32 %v915, %v914
      %v917 = vmul.f32 0.5, %v916
      %v918 = vsub.f32 1.5, %v917
      %v919 = vmul.f32 %v914, %v918
      %vm920 = vweird.f32 %v844
      %vm921 = vweird.f32 %v914
      %vm922 = vmor %vm920, %vm921
      %v923 = vsel %vm922, %v914, %v919
      %v924 = vrsqrt.pop %v845
      %v925 = vmul.f32 %v924, %v845
      %v926 = vmul.f32 %v925, %v924
      %v927 = vmul.f32 0.5, %v926
      %v928 = vsub.f32 1.5, %v927
      %v929 = vmul.f32 %v924, %v928
      %vm930 = vweird.f32 %v845
      %vm931 = vweird.f32 %v924
      %vm932 = vmor %vm930, %vm931
      %v933 = vsel %vm932, %v924, %v929
      %v934 = vrsqrt.pop %v846
      %v935 = vmul.f32 %v934, %v846
      %v936 = vmul.f32 %v935, %v934
      %v937 = vmul.f32 0.5, %v936
      %v938 = vsub.f32 1.5, %v937
      %v939 = vmul.f32 %v934, %v938
      %vm940 = vweird.f32 %v846
      %vm941 = vweird.f32 %v934
      %vm942 = vmor %vm940, %vm941
      %v943 = vsel %vm942, %v934, %v939
      %v944 = vrsqrt.pop %v847
      %v945 = vmul.f32 %v944, %v847
      %v946 = vmul.f32 %v945, %v944
      %v947 = vmul.f32 0.5, %v946
      %v948 = vsub.f32 1.5, %v947
      %v949 = vmul.f32 %v944, %v948
      %vm950 = vweird.f32 %v847
      %vm951 = vweird.f32 %v944
      %vm952 = vmor %vm950, %vm951
      %v953 = vsel %vm952, %v944, %v949
      %v954 = vrsqrt.pop %v848
      %v955 = vmul.f32 %v954, %v848
      %v956 = vmul.f32 %v955, %v954
      %v957 = vmul.f32 0.5, %v956
      %v958 = vsub.f32 1.5, %v957
      %v959 = vmul.f32 %v954, %v958
      %vm960 = vweird.f32 %v848
      %vm961 = vweird.f32 %v954
      %vm962 = vmor %vm960, %vm961
      %v963 = vsel %vm962, %v954, %v959
      %v964 = vrsqrt.pop %v849
      %v965 = vmul.f32 %v964, %v849
      %v966 = vmul.f32 %v965, %v964
      %v967 = vmul.f32 0.5, %v966
      %v968 = vsub.f32 1.5, %v967
      %v969 = vmul.f32 %v964, %v968
      %vm970 = vweird.f32 %v849
      %vm971 = vweird.f32 %v964
      %vm972 = vmor %vm970, %vm971
      %v973 = vsel %vm972, %v964, %v969
      %v974 = vrsqrt.pop %v850
      %v975 = vmul.f32 %v974, %v850
      %v976 = vmul.f32 %v975, %v974
      %v977 = vmul.f32 0.5, %v976
      %v978 = vsub.f32 1.5, %v977
      %v979 = vmul.f32 %v974, %v978
      %vm980 = vweird.f32 %v850
      %vm981 = vweird.f32 %v974
      %vm982 = vmor %vm980, %vm981
      %v983 = vsel %vm982, %v974, %v979
      %v984 = vrsqrt.pop %v851
      %v985 = vmul.f32 %v984, %v851
      %v986 = vmul.f32 %v985, %v984
      %v987 = vmul.f32 0.5, %v986
      %v988 = vsub.f32 1.5, %v987
      %v989 = vmul.f32 %v984, %v988
      %vm990 = vweird.f32 %v851
      %vm991 = vweird.f32 %v984
      %vm992 = vmor %vm990, %vm991
      %v993 = vsel %vm992, %v984, %v989
      %v994 = vrsqrt.pop %v852
      %v995 = vmul.f32 %v994, %v852
      %v996 = vmul.f32 %v995, %v994
      %v997 = vmul.f32 0.5, %v996
      %v998 = vsub.f32 1.5, %v997
      %v999 = vmul.f32 %v994, %v998
      %vm1000 = vweird.f32 %v852
      %vm1001 = vweird.f32 %v994
      %vm1002 = vmor %vm1000, %vm1001
      %v1003 = vsel %vm1002, %v994, %v999
      %v1004 = vrsqrt.pop %v853
      %v1005 = vmul.f32 %v1004, %v853
      %v1006 = vmul.f32 %v1005, %v1004
      %v1007 = vmul.f32 0.5, %v1006
      %v1008 = vsub.f32 1.5, %v1007
      %v1009 = vmul.f32 %v1004, %v1008
      %vm1010 = vweird.f32 %v853
      %vm1011 = vweird.f32 %v1004
      %vm1012 = vmor %vm1010, %vm1011
      %v1013 = vsel %vm1012, %v1004, %v1009
      %v1014 = vmul.f32 %v822, %v863
      %v1015 = vmul.f32 %v823, %v873
      %v1016 = vmul.f32 %v824, %v883
      %v1017 = vmul.f32 %v825, %v893
      %v1018 = vmul.f32 %v826, %v903
      %v1019 = vmul.f32 %v827, %v913
      %v1020 = vmul.f32 %v828, %v923
      %v1021 = vmul.f32 %v829, %v933
      %v1022 = vmul.f32 %v830, %v943
      %v1023 = vmul.f32 %v831, %v953
      %v1024 = vmul.f32 %v832, %v963
      %v1025 = vmul.f32 %v833, %v973
      %v1026 = vmul.f32 %v834, %v983
      %v1027 = vmul.f32 %v835, %v993
      %v1028 = vmul.f32 %v836, %v1003
      %v1029 = vmul.f32 %v837, %v1013
      %v1030 = vld [vmem:[#allocation11 + $0x1] sm:$0x1]
      %v1031 = vperm.slane %v1030, 0
      %v1032 = vmul.f32 %v1014, %v1031
      %v1033 = vmul.f32 %v1015, %v1031
      %v1034 = vmul.f32 %v1016, %v1031
      %v1035 = vmul.f32 %v1017, %v1031
      %v1036 = vmul.f32 %v1018, %v1031
      %v1037 = vmul.f32 %v1019, %v1031
      %v1038 = vmul.f32 %v1020, %v1031
      %v1039 = vmul.f32 %v1021, %v1031
      %v1040 = vmul.f32 %v1022, %v1031
      %v1041 = vmul.f32 %v1023, %v1031
      %v1042 = vmul.f32 %v1024, %v1031
      %v1043 = vmul.f32 %v1025, %v1031
      %v1044 = vmul.f32 %v1026, %v1031
      %v1045 = vmul.f32 %v1027, %v1031
      %v1046 = vmul.f32 %v1028, %v1031
      %v1047 = vmul.f32 %v1029, %v1031
      %v1048 = vld [vmem:[#allocation11 + $0x2] sm:$0x1]
      %v1049 = vperm.slane %v1048, 0
      %v1050 = vadd.f32 %v1032, %v1049
      %v1051 = vadd.f32 %v1033, %v1049
      %v1052 = vadd.f32 %v1034, %v1049
      %v1053 = vadd.f32 %v1035, %v1049
      %v1054 = vadd.f32 %v1036, %v1049
      %v1055 = vadd.f32 %v1037, %v1049
      %v1056 = vadd.f32 %v1038, %v1049
      %v1057 = vadd.f32 %v1039, %v1049
      %v1058 = vadd.f32 %v1040, %v1049
      %v1059 = vadd.f32 %v1041, %v1049
      %v1060 = vadd.f32 %v1042, %v1049
      %v1061 = vadd.f32 %v1043, %v1049
      %v1062 = vadd.f32 %v1044, %v1049
      %v1063 = vadd.f32 %v1045, %v1049
      %v1064 = vadd.f32 %v1046, %v1049
      %v1065 = vadd.f32 %v1047, %v1049
      %v1066 = vmax.f32 %v1050, 0.0
      %v1067 = vmax.f32 %v1051, 0.0
      %v1068 = vmax.f32 %v1052, 0.0
      %v1069 = vmax.f32 %v1053, 0.0
      %v1070 = vmax.f32 %v1054, 0.0
      %v1071 = vmax.f32 %v1055, 0.0
      %v1072 = vmax.f32 %v1056, 0.0
      %v1073 = vmax.f32 %v1057, 0.0
      %v1074 = vmax.f32 %v1058, 0.0
      %v1075 = vmax.f32 %v1059, 0.0
      %v1076 = vmax.f32 %v1060, 0.0
      %v1077 = vmax.f32 %v1061, 0.0
      %v1078 = vmax.f32 %v1062, 0.0
      %v1079 = vmax.f32 %v1063, 0.0
      %v1080 = vmax.f32 %v1064, 0.0
      %v1081 = vmax.f32 %v1065, 0.0
      %v1082 = vpack.c.bf16 %v1066, %v1066
      %v1083 = vpack.c.bf16 %v1067, %v1067
      %v1084 = vpack.c.bf16 %v1068, %v1068
      %v1085 = vpack.c.bf16 %v1069, %v1069
      %v1086 = vpack.c.bf16 %v1070, %v1070
      %v1087 = vpack.c.bf16 %v1071, %v1071
      %v1088 = vpack.c.bf16 %v1072, %v1072
      %v1089 = vpack.c.bf16 %v1073, %v1073
      %v1090 = vpack.c.bf16 %v1074, %v1074
      %v1091 = vpack.c.bf16 %v1075, %v1075
      %v1092 = vpack.c.bf16 %v1076, %v1076
      %v1093 = vpack.c.bf16 %v1077, %v1077
      %v1094 = vpack.c.bf16 %v1078, %v1078
      %v1095 = vpack.c.bf16 %v1079, %v1079
      %v1096 = vpack.c.bf16 %v1080, %v1080
      %v1097 = vpack.c.bf16 %v1081, %v1081
      %1098 = vst [vmem:[#allocation12] sm:$0xf] %v1082
      %1099 = vst [vmem:[#allocation12 + $0x4] sm:$0xf] %v1083
      %1100 = vst [vmem:[#allocation12 + $0x8] sm:$0xf] %v1084
      %1101 = vst [vmem:[#allocation12 + $0xc] sm:$0xf] %v1085
      %1102 = vst [vmem:[#allocation12 + $0x10] sm:$0xf] %v1086
      %1103 = vst [vmem:[#allocation12 + $0x14] sm:$0xf] %v1087
      %1104 = vst [vmem:[#allocation12 + $0x18] sm:$0xf] %v1088
      %1105 = vst [vmem:[#allocation12 + $0x1c] sm:$0xf] %v1089
      %1106 = vst [vmem:[#allocation12 + $0x20] sm:$0xf] %v1090
      %1107 = vst [vmem:[#allocation12 + $0x24] sm:$0xf] %v1091
      %1108 = vst [vmem:[#allocation12 + $0x28] sm:$0xf] %v1092
      %1109 = vst [vmem:[#allocation12 + $0x2c] sm:$0xf] %v1093
      %1110 = vst [vmem:[#allocation12 + $0x30] sm:$0xf] %v1094
      %1111 = vst [vmem:[#allocation12 + $0x34] sm:$0xf] %v1095
      %1112 = vst [vmem:[#allocation12 + $0x38] sm:$0xf] %v1096
      %1113 = vst [vmem:[#allocation12 + $0x3c] sm:$0xf] %v1097
    $region49: #{tpu_custom_call.1} parent=1 // pred_fallthru
      _
    // Predicated region
    $region50: #{tpu_custom_call.1} parent=1 // pred_check
      _
    $region51: #{tpu_custom_call.1} parent=1 // pred_check_branch
      %1115 = sbr.rel (0) target = $region53
    $region52: #{tpu_custom_call.1} parent=1 // pred_region
      %1117 = vsyncadd [#allocation5], 0
      %s1118 = sshll.u32 [#allocation12], 4
      %s1119 = int_to_ptr.vmem [resolvable:$true] %s1118
      %s1120 = sshll.u32 %s5, 4
      %s1121 = int_to_ptr.hbm [resolvable:$true] %s1120
      %1126 = dma.vmem_to_hbm [thread:$0]  %s1119, 1024, %s1121, [#allocation5], 64, 64, 4
    $region53: #{tpu_custom_call.1} parent=1 // pred_fallthru
      _
    // Predicated region
    $region54: #{tpu_custom_call.1} parent=1 // pred_check
      _
    $region55: #{tpu_custom_call.1} parent=1 // pred_check_branch
      %1128 = sbr.rel (0) target = $region57
    $region56: #{tpu_custom_call.1} parent=1 // pred_region
      %1130 = dma.done [#allocation5], 1024
    $region57: #{tpu_custom_call.1} parent=1 // pred_fallthru
      _
    %1131 = vsyncpa [#allocation4], 1
    %1132 = vsyncpa [#allocation7], 1
    %1133 = vsyncpa [#allocation10], 1
    %1134 = vsyncpa [#allocation5], 1

</llo_original>
